<compile_context>
chip_gen: v5e
topology: v5e:2x2
jax: 0.10.0
libtpu: 0.0.40
codegen_flags: <defaults>
</compile_context>

<pallas_src>
import functools

import jax
import jax.numpy as jnp
from jax import lax
from jax.experimental import pallas as pl
from jax.experimental.pallas import tpu as pltpu


def _round_up(x, m):
    return (x + m - 1) // m * m


def _eml_tile_kernel(eps_ref, h_ref, e_t_ref, out_ref, *, n_valid, m_valid, tn, mp):
    eps = eps_ref[...]   # (TN, 1)  epsilon = x - y   (padded rows = 0)
    h = h_ref[...]       # (TN, 1)  bandwidths        (padded rows = 1)
    e_t = e_t_ref[...]   # (1, Mp)  e.T, padded to a 128-lane multiple with 0s

    # Hoisted per-row reciprocals: (TN,1) work only, keeps the EUP for the exp.
    inv_h = 1.0 / h
    inv_h2 = inv_h * inv_h

    # ||eps_i - e_j||^2 = -2*eps_i*e_j + eps_i^2 + e_j^2  (feature dim == 1).
    # Keep the outer product as a VPU broadcast multiply (not a K=1 matmul).
    dist1 = -2.0 * eps * e_t          # (TN, Mp)
    dist2 = eps * eps                 # (TN, 1)
    dist3 = e_t * e_t                 # (1, Mp)
    dist = jnp.abs(dist1 + dist2 + dist3)

    # exp(-dist / h^2) / h, with the divides pre-hoisted; clamp AFTER the
    # multiply by 1/h, exactly like the reference.
    k_hat = jnp.exp(-dist * inv_h2) * inv_h
    k_hat = jnp.maximum(k_hat, jnp.float32(1e-5))

    # Mask padded subset columns out of the row mean; divide by the true M.
    col_idx = lax.broadcasted_iota(jnp.int32, (tn, mp), 1)
    k_hat = jnp.where(col_idx < m_valid, k_hat, 0.0)
    row_mean = jnp.sum(k_hat, axis=1, keepdims=True) * jnp.float32(1.0 / m_valid)
    loss_row = -jnp.log(row_mean)     # (TN, 1)

    # Mask padded rows and emit this tile's partial sum, lane-dense (128 wide).
    row_idx = pl.program_id(0) * tn + lax.broadcasted_iota(jnp.int32, (tn, 1), 0)
    loss_row = jnp.where(row_idx < n_valid, loss_row, 0.0)
    partial = jnp.sum(loss_row)
    out_ref[...] = jnp.broadcast_to(partial, (1, 128)).astype(jnp.float32)


def eml_loss(x, y, h, perm_key, *, tile_n=256):
    """Pallas implementation of EML.forward(x, y, h)."""
    eps = (x - y).astype(jnp.float32).reshape(-1, 1)   # (N, 1)
    n = eps.shape[0]
    m = max(n // 4, 1)

    # torch.randperm(N)[:N//4] -> deterministic JAX permutation (glue).
    idx = jax.random.permutation(perm_key, n)[:m]
    e_t = eps[idx].reshape(1, m)                        # (1, M) gather + transpose
    h_col = h.reshape(-1, 1).astype(jnp.float32)        # (N, 1)

    # Tiling: rows padded to a multiple of TN, subset padded to 128 lanes.
    tn = min(tile_n, _round_up(n, 8))
    np_rows = _round_up(n, tn)
    mp = _round_up(m, 128)
    num_tiles = np_rows // tn

    eps_p = jnp.pad(eps, ((0, np_rows - n), (0, 0)))
    h_p = jnp.pad(h_col, ((0, np_rows - n), (0, 0)), constant_values=1.0)
    e_t_p = jnp.pad(e_t, ((0, 0), (0, mp - m)))

    kernel = functools.partial(
        _eml_tile_kernel, n_valid=n, m_valid=m, tn=tn, mp=mp)

    # VMEM budget sized from the real tile footprint (a handful of (TN, Mp)
    # temporaries + double-buffered inputs), clamped to a safe ceiling.
    # TODO(synk): for very large N the whole padded subset (Mp) stays resident;
    # tiling over M as well would be needed beyond that point.
    vmem_bytes = 4 * (6 * tn * mp + 16 * tn + 8 * mp) * 2
    vmem_bytes = int(min(max(vmem_bytes, 4 << 20), 32 << 20))

    partials = pl.pallas_call(
        kernel,
        out_shape=jax.ShapeDtypeStruct((1, num_tiles * 128), jnp.float32),
        grid=(num_tiles,),
        in_specs=[
            pl.BlockSpec((tn, 1), lambda i: (i, 0)),     # eps tile
            pl.BlockSpec((tn, 1), lambda i: (i, 0)),     # h tile
            pl.BlockSpec((1, mp), lambda i: (0, 0)),     # subset stays resident
        ],
        out_specs=pl.BlockSpec((1, 128), lambda i: (0, i)),
        compiler_params=pltpu.CompilerParams(
            dimension_semantics=("parallel",),           # independent tiles (v7x megacore)
            vmem_limit_bytes=vmem_bytes,
        ),
    )(eps_p, h_p, e_t_p)

    per_tile = partials.reshape(num_tiles, 128)[:, 0]    # each lane holds the same value
    return jnp.sum(per_tile) / jnp.float32(n)


def eml_loss_ref(x, y, h, perm_key):
    """Pure-JAX reference mirroring the torch module (same permutation key)."""
    eps = (x - y).astype(jnp.float32)
    n = eps.shape[0]
    idx = jax.random.permutation(perm_key, n)[: n // 4]
    e = eps[idx]
    dist1 = -2.0 * eps * e.T
    dist2 = jnp.sum(jnp.square(eps), axis=1, keepdims=True)
    dist3 = jnp.sum(jnp.square(e), axis=1, keepdims=True).T
    dist = jnp.abs(dist1 + dist2 + dist3)
    h_col = h.reshape(-1, 1).astype(jnp.float32)
    k_hat = jnp.exp(-dist / jnp.square(h_col)) / h_col
    k_hat = jnp.where(k_hat < 1e-5, 1e-5, k_hat)
    loss_matrix = -jnp.log(jnp.mean(k_hat, axis=1))
    return jnp.mean(loss_matrix)


if __name__ == "__main__":
    key = jax.random.PRNGKey(0)
    kx, ky, kh, kperm = jax.random.split(key, 4)

    N = 64   # batch of scalar errors; subset size M = N // 4 = 16
    x = jax.random.normal(kx, (N, 1), dtype=jnp.float32)
    y = jax.random.normal(ky, (N, 1), dtype=jnp.float32)
    h = jax.random.uniform(kh, (N,), dtype=jnp.float32, minval=0.5, maxval=1.5)

    loss = eml_loss(x, y, h, kperm)
    jax.block_until_ready(loss)

    ref = eml_loss_ref(x, y, h, kperm)
    assert jnp.isfinite(loss), "loss is not finite"
    assert jnp.allclose(loss, ref, rtol=1e-5, atol=1e-5), (loss, ref)

    print("KERNEL_OK")
</pallas_src>

<mosaic_0001>
module attributes {stable_mosaic.version = 11 : i64} {
  func.func @_eml_tile_kernel(%arg0: i32, %arg1: memref<64x1xf32, #tpu.memory_space<vmem>>, %arg2: memref<64x1xf32, #tpu.memory_space<vmem>>, %arg3: memref<1x128xf32, #tpu.memory_space<vmem>>, %arg4: memref<1x128xf32, #tpu.memory_space<vmem>>) attributes {dimension_semantics = [#tpu.dimension_semantics<parallel>], iteration_bounds = array<i64: 1>, scalar_prefetch = 0 : i64, scratch_operands = 0 : i64, tpu.core_type = #tpu.core_type<tc>, window_params = [{transform_indices = @transform_0, window_bounds = array<i64: 64, 1>}, {transform_indices = @transform_1, window_bounds = array<i64: 64, 1>}, {pipeline_mode = #tpu.pipeline_mode<synchronous>, transform_indices = @transform_2, window_bounds = array<i64: 1, 128>}, {transform_indices = @transform_3, window_bounds = array<i64: 1, 128>}]} {
    %c0 = arith.constant 0 : index
    %c0_0 = arith.constant 0 : index
    %0 = vector.load %arg1[%c0, %c0_0] : memref<64x1xf32, #tpu.memory_space<vmem>>, vector<64x1xf32>
    %c0_1 = arith.constant 0 : index
    %c0_2 = arith.constant 0 : index
    %1 = vector.load %arg2[%c0_1, %c0_2] : memref<64x1xf32, #tpu.memory_space<vmem>>, vector<64x1xf32>
    %c0_3 = arith.constant 0 : index
    %c0_4 = arith.constant 0 : index
    %2 = vector.load %arg3[%c0_3, %c0_4] : memref<1x128xf32, #tpu.memory_space<vmem>>, vector<1x128xf32>
    %cst = arith.constant 1.000000e+00 : f32
    %3 = vector.broadcast %cst : f32 to vector<64x1xf32>
    %4 = arith.divf %3, %1 : vector<64x1xf32>
    %5 = arith.mulf %4, %4 : vector<64x1xf32>
    %cst_5 = arith.constant -2.000000e+00 : f32
    %6 = vector.broadcast %cst_5 : f32 to vector<64x1xf32>
    %7 = arith.mulf %6, %0 : vector<64x1xf32>
    %8 = vector.broadcast %7 : vector<64x1xf32> to vector<64x128xf32>
    %9 = vector.broadcast %2 : vector<1x128xf32> to vector<64x128xf32>
    %10 = arith.mulf %8, %9 : vector<64x128xf32>
    %11 = arith.mulf %0, %0 : vector<64x1xf32>
    %12 = arith.mulf %2, %2 : vector<1x128xf32>
    %13 = vector.broadcast %11 : vector<64x1xf32> to vector<64x128xf32>
    %14 = arith.addf %10, %13 : vector<64x128xf32>
    %15 = vector.broadcast %12 : vector<1x128xf32> to vector<64x128xf32>
    %16 = arith.addf %14, %15 : vector<64x128xf32>
    %17 = math.absf %16 : vector<64x128xf32>
    %cst_6 = arith.constant 0.000000e+00 : f32
    %18 = vector.broadcast %cst_6 : f32 to vector<64x128xf32>
    %19 = arith.subf %18, %17 : vector<64x128xf32>
    %20 = vector.broadcast %5 : vector<64x1xf32> to vector<64x128xf32>
    %21 = arith.mulf %19, %20 : vector<64x128xf32>
    %22 = math.exp %21 : vector<64x128xf32>
    %23 = vector.broadcast %4 : vector<64x1xf32> to vector<64x128xf32>
    %24 = arith.mulf %22, %23 : vector<64x128xf32>
    %cst_7 = arith.constant 9.99999974E-6 : f32
    %25 = vector.broadcast %cst_7 : f32 to vector<64x128xf32>
    %26 = arith.maximumf %24, %25 : vector<64x128xf32>
    %27 = tpu.iota {dimensions = array<i32: 1>} : vector<64x128xi32>
    %c16_i32 = arith.constant 16 : i32
    %28 = vector.broadcast %c16_i32 : i32 to vector<64x128xi32>
    %29 = arith.cmpi slt, %27, %28 : vector<64x128xi32>
    %cst_8 = arith.constant 0.000000e+00 : f32
    %30 = vector.broadcast %cst_8 : f32 to vector<64x128xf32>
    %31 = arith.select %29, %26, %30 : vector<64x128xi1>, vector<64x128xf32>
    %cst_9 = arith.constant dense<0.000000e+00> : vector<64xf32>
    %32 = vector.multi_reduction <add>, %31, %cst_9 [1] : vector<64x128xf32> to vector<64xf32>
    %33 = vector.shape_cast %32 : vector<64xf32> to vector<64x1xf32>
    %cst_10 = arith.constant 6.250000e-02 : f32
    %34 = vector.broadcast %cst_10 : f32 to vector<64x1xf32>
    %35 = arith.mulf %33, %34 : vector<64x1xf32>
    %36 = math.log %35 : vector<64x1xf32>
    %cst_11 = arith.constant 0.000000e+00 : f32
    %37 = vector.broadcast %cst_11 : f32 to vector<64x1xf32>
    %38 = arith.subf %37, %36 : vector<64x1xf32>
    %c64_i32 = arith.constant 64 : i32
    %39 = arith.muli %arg0, %c64_i32 : i32
    %40 = tpu.iota {dimensions = array<i32: 0>} : vector<64x1xi32>
    %41 = vector.broadcast %39 : i32 to vector<64x1xi32>
    %42 = arith.addi %41, %40 : vector<64x1xi32>
    %c64_i32_12 = arith.constant 64 : i32
    %43 = vector.broadcast %c64_i32_12 : i32 to vector<64x1xi32>
    %44 = arith.cmpi slt, %42, %43 : vector<64x1xi32>
    %cst_13 = arith.constant 0.000000e+00 : f32
    %45 = vector.broadcast %cst_13 : f32 to vector<64x1xf32>
    %46 = arith.select %44, %38, %45 : vector<64x1xi1>, vector<64x1xf32>
    %47 = vector.shape_cast %46 : vector<64x1xf32> to vector<1x64x1xf32>
    %cst_14 = arith.constant dense<0.000000e+00> : vector<1xf32>
    %48 = vector.multi_reduction <add>, %47, %cst_14 [1, 2] : vector<1x64x1xf32> to vector<1xf32>
    %49 = vector.shape_cast %48 : vector<1xf32> to vector<1x1x1xf32>
    %50 = vector.extract %49[0, 0, 0] : f32 from vector<1x1x1xf32>
    %51 = vector.broadcast %50 : f32 to vector<1x128xf32>
    %c0_15 = arith.constant 0 : index
    %c0_16 = arith.constant 0 : index
    %52 = vector.load %arg4[%c0_15, %c0_16] : memref<1x128xf32, #tpu.memory_space<vmem>>, vector<1x128xf32>
    tpu.vector_store %arg4[%c0_15, %c0_16], %51 {strides = array<i32>} : memref<1x128xf32, #tpu.memory_space<vmem>>, vector<1x128xf32>,
    return
  }
  func.func @transform_0(%arg0: i32) -> (i32, i32) {
    %c0_i32 = arith.constant 0 : i32
    %c0_i32_0 = arith.constant 0 : i32
    return %arg0, %c0_i32 : i32, i32
  }
  func.func @transform_1(%arg0: i32) -> (i32, i32) {
    %c0_i32 = arith.constant 0 : i32
    %c0_i32_0 = arith.constant 0 : i32
    return %arg0, %c0_i32 : i32, i32
  }
  func.func @transform_2(%arg0: i32) -> (i32, i32) {
    %c0_i32 = arith.constant 0 : i32
    %c0_i32_0 = arith.constant 0 : i32
    %c0_i32_1 = arith.constant 0 : i32
    return %c0_i32, %c0_i32_0 : i32, i32
  }
  func.func @transform_3(%arg0: i32) -> (i32, i32) {
    %c0_i32 = arith.constant 0 : i32
    %c0_i32_0 = arith.constant 0 : i32
    return %c0_i32, %arg0 : i32, i32
  }
}

</mosaic_0001>

<llo_original>
// kernel: tpu_custom_call.1
$region0: #{tpu_custom_call.1}
  #allocation0 [shape = 'u32[]', space=smem, size = 0x4, offset = 0x4, fixed_abs, tag = 'smem constant byte address 0x4 - core index']
  #allocation1 [shape = 'u32[72,128]{1,0:T(1,128)}', space=vmem, size = 0x9000, scoped, tag = 'internal scratch']
  %s0 = inlined_call_operand.vmem [shape: f32[64,1], index: 0, kind: input, shape index: {}]
  %s1 = inlined_call_operand.vmem [shape: f32[64,1], index: 1, kind: input, shape index: {}]
  %s2 = inlined_call_operand.vmem [shape: f32[1,128], index: 2, kind: input, shape index: {}]
  %s3 = inlined_call_operand.hbm [shape: f32[1,128], index: 3, kind: output, shape index: {}]
  %s4 = sld [smem:[#allocation0]]
  $region22: #{tpu_custom_call.1} parent=0
    _
  %s6 = ssub.s32 1, %s4
  %s7 = scalar_select 0, %s6, %s4
  $region1: #{tpu_custom_call.1} parent=0
    #allocation2 [shape = 'u8[512]{0}', space=vmem, size = 0x400, scoped, tag = 'output window, operand 0, single buffered']
    #allocation3 [shape = 's32[1]{0}', space=sflag, size = 0x4, scoped, tag = 'scoped memory for tpu_custom_call.1']
    %8 = vsyncpa [#allocation3], 0
    // Predicated region
    $region2: #{tpu_custom_call.1} parent=1 // pred_check
      _
    $region3: #{tpu_custom_call.1} parent=1 // pred_check_branch
      %10 = sbr.rel (0) target = $region5
    $region4: #{tpu_custom_call.1} parent=1 // pred_region
      _
    $region5: #{tpu_custom_call.1} parent=1 // pred_fallthru
      _
    // Predicated region
    $region6: #{tpu_custom_call.1} parent=1 // pred_check
      _
    $region7: #{tpu_custom_call.1} parent=1 // pred_check_branch
      %12 = sbr.rel (0) target = $region9
    $region8: #{tpu_custom_call.1} parent=1 // pred_region
      _
    $region9: #{tpu_custom_call.1} parent=1 // pred_fallthru
      _
    // Predicated region
    $region10: #{tpu_custom_call.1} parent=1 // pred_check
      _
    $region11: #{tpu_custom_call.1} parent=1 // pred_check_branch
      %14 = sbr.rel (0) target = $region13
    $region12: #{tpu_custom_call.1} parent=1 // pred_region
      _
    $region13: #{tpu_custom_call.1} parent=1 // pred_fallthru
      _
    %v15 = vld [vmem:[%s0] sm:$0xff]
    %v16 = vld [vmem:[%s0 + $0x8] sm:$0xff]
    %v17 = vld [vmem:[%s0 + $0x10] sm:$0xff]
    %v18 = vld [vmem:[%s0 + $0x18] sm:$0xff]
    %v19 = vld [vmem:[%s0 + $0x20] sm:$0xff]
    %v20 = vld [vmem:[%s0 + $0x28] sm:$0xff]
    %v21 = vld [vmem:[%s0 + $0x30] sm:$0xff]
    %v22 = vld [vmem:[%s0 + $0x38] sm:$0xff]
    %v23 = vld [vmem:[%s1] sm:$0xff]
    %v24 = vld [vmem:[%s1 + $0x8] sm:$0xff]
    %v25 = vld [vmem:[%s1 + $0x10] sm:$0xff]
    %v26 = vld [vmem:[%s1 + $0x18] sm:$0xff]
    %v27 = vld [vmem:[%s1 + $0x20] sm:$0xff]
    %v28 = vld [vmem:[%s1 + $0x28] sm:$0xff]
    %v29 = vld [vmem:[%s1 + $0x30] sm:$0xff]
    %v30 = vld [vmem:[%s1 + $0x38] sm:$0xff]
    %v31 = vld [vmem:[%s2] sm:$0x1]
    %v32 = vrcp.pop %v23
    %v33 = vmul.f32 %v23, %v32
    %v34 = vsub.f32 1.0, %v33
    %v35 = vmul.f32 %v32, %v34
    %v36 = vadd.f32 %v32, %v35
    %vm37 = vweird.f32 %v23
    %vm38 = vweird.f32 %v32
    %vm39 = vmor %vm37, %vm38
    %v40 = vsel %vm39, %v32, %v36
    %v41 = vand.u32 2147483647, %v23
    %vm42 = vcmp.eq.f32.partialorder %v41, 8.507059e+37
    %v43 = vand.u32 %v23, 2147483648
    %v44 = vor.u32 1.1754944e-38, %v43
    %v45 = vsel %vm42, %v44, %v40
    %v46 = vmul.f32 1.0, %v45
    %v47 = vrcp.pop %v24
    %v48 = vmul.f32 %v24, %v47
    %v49 = vsub.f32 1.0, %v48
    %v50 = vmul.f32 %v47, %v49
    %v51 = vadd.f32 %v47, %v50
    %vm52 = vweird.f32 %v24
    %vm53 = vweird.f32 %v47
    %vm54 = vmor %vm52, %vm53
    %v55 = vsel %vm54, %v47, %v51
    %v56 = vand.u32 2147483647, %v24
    %vm57 = vcmp.eq.f32.partialorder %v56, 8.507059e+37
    %v58 = vand.u32 %v24, 2147483648
    %v59 = vor.u32 1.1754944e-38, %v58
    %v60 = vsel %vm57, %v59, %v55
    %v61 = vmul.f32 1.0, %v60
    %v62 = vrcp.pop %v25
    %v63 = vmul.f32 %v25, %v62
    %v64 = vsub.f32 1.0, %v63
    %v65 = vmul.f32 %v62, %v64
    %v66 = vadd.f32 %v62, %v65
    %vm67 = vweird.f32 %v25
    %vm68 = vweird.f32 %v62
    %vm69 = vmor %vm67, %vm68
    %v70 = vsel %vm69, %v62, %v66
    %v71 = vand.u32 2147483647, %v25
    %vm72 = vcmp.eq.f32.partialorder %v71, 8.507059e+37
    %v73 = vand.u32 %v25, 2147483648
    %v74 = vor.u32 1.1754944e-38, %v73
    %v75 = vsel %vm72, %v74, %v70
    %v76 = vmul.f32 1.0, %v75
    %v77 = vrcp.pop %v26
    %v78 = vmul.f32 %v26, %v77
    %v79 = vsub.f32 1.0, %v78
    %v80 = vmul.f32 %v77, %v79
    %v81 = vadd.f32 %v77, %v80
    %vm82 = vweird.f32 %v26
    %vm83 = vweird.f32 %v77
    %vm84 = vmor %vm82, %vm83
    %v85 = vsel %vm84, %v77, %v81
    %v86 = vand.u32 2147483647, %v26
    %vm87 = vcmp.eq.f32.partialorder %v86, 8.507059e+37
    %v88 = vand.u32 %v26, 2147483648
    %v89 = vor.u32 1.1754944e-38, %v88
    %v90 = vsel %vm87, %v89, %v85
    %v91 = vmul.f32 1.0, %v90
    %v92 = vrcp.pop %v27
    %v93 = vmul.f32 %v27, %v92
    %v94 = vsub.f32 1.0, %v93
    %v95 = vmul.f32 %v92, %v94
    %v96 = vadd.f32 %v92, %v95
    %vm97 = vweird.f32 %v27
    %vm98 = vweird.f32 %v92
    %vm99 = vmor %vm97, %vm98
    %v100 = vsel %vm99, %v92, %v96
    %v101 = vand.u32 2147483647, %v27
    %vm102 = vcmp.eq.f32.partialorder %v101, 8.507059e+37
    %v103 = vand.u32 %v27, 2147483648
    %v104 = vor.u32 1.1754944e-38, %v103
    %v105 = vsel %vm102, %v104, %v100
    %v106 = vmul.f32 1.0, %v105
    %v107 = vrcp.pop %v28
    %v108 = vmul.f32 %v28, %v107
    %v109 = vsub.f32 1.0, %v108
    %v110 = vmul.f32 %v107, %v109
    %v111 = vadd.f32 %v107, %v110
    %vm112 = vweird.f32 %v28
    %vm113 = vweird.f32 %v107
    %vm114 = vmor %vm112, %vm113
    %v115 = vsel %vm114, %v107, %v111
    %v116 = vand.u32 2147483647, %v28
    %vm117 = vcmp.eq.f32.partialorder %v116, 8.507059e+37
    %v118 = vand.u32 %v28, 2147483648
    %v119 = vor.u32 1.1754944e-38, %v118
    %v120 = vsel %vm117, %v119, %v115
    %v121 = vmul.f32 1.0, %v120
    %v122 = vrcp.pop %v29
    %v123 = vmul.f32 %v29, %v122
    %v124 = vsub.f32 1.0, %v123
    %v125 = vmul.f32 %v122, %v124
    %v126 = vadd.f32 %v122, %v125
    %vm127 = vweird.f32 %v29
    %vm128 = vweird.f32 %v122
    %vm129 = vmor %vm127, %vm128
    %v130 = vsel %vm129, %v122, %v126
    %v131 = vand.u32 2147483647, %v29
    %vm132 = vcmp.eq.f32.partialorder %v131, 8.507059e+37
    %v133 = vand.u32 %v29, 2147483648
    %v134 = vor.u32 1.1754944e-38, %v133
    %v135 = vsel %vm132, %v134, %v130
    %v136 = vmul.f32 1.0, %v135
    %v137 = vrcp.pop %v30
    %v138 = vmul.f32 %v30, %v137
    %v139 = vsub.f32 1.0, %v138
    %v140 = vmul.f32 %v137, %v139
    %v141 = vadd.f32 %v137, %v140
    %vm142 = vweird.f32 %v30
    %vm143 = vweird.f32 %v137
    %vm144 = vmor %vm142, %vm143
    %v145 = vsel %vm144, %v137, %v141
    %v146 = vand.u32 2147483647, %v30
    %vm147 = vcmp.eq.f32.partialorder %v146, 8.507059e+37
    %v148 = vand.u32 %v30, 2147483648
    %v149 = vor.u32 1.1754944e-38, %v148
    %v150 = vsel %vm147, %v149, %v145
    %v151 = vmul.f32 1.0, %v150
    %v152 = vmul.f32 %v46, %v46
    %v153 = vmul.f32 %v61, %v61
    %v154 = vmul.f32 %v76, %v76
    %v155 = vmul.f32 %v91, %v91
    %v156 = vmul.f32 %v106, %v106
    %v157 = vmul.f32 %v121, %v121
    %v158 = vmul.f32 %v136, %v136
    %v159 = vmul.f32 %v151, %v151
    %v160 = vmul.f32 %v15, -2.0
    %v161 = vmul.f32 %v16, -2.0
    %v162 = vmul.f32 %v17, -2.0
    %v163 = vmul.f32 %v18, -2.0
    %v164 = vmul.f32 %v19, -2.0
    %v165 = vmul.f32 %v20, -2.0
    %v166 = vmul.f32 %v21, -2.0
    %v167 = vmul.f32 %v22, -2.0
    %169 = vset.pattern.permute.xlu0 0
    %170 = vperm.xlu0 %169, %v160
    %v171 = vpop.permute.xlu0 %170
    %174 = vset.pattern.permute.xlu0 0
    %175 = vperm.xlu0 %174, %v161
    %v176 = vpop.permute.xlu0 %175
    %179 = vset.pattern.permute.xlu0 0
    %180 = vperm.xlu0 %179, %v162
    %v181 = vpop.permute.xlu0 %180
    %184 = vset.pattern.permute.xlu0 0
    %185 = vperm.xlu0 %184, %v163
    %v186 = vpop.permute.xlu0 %185
    %189 = vset.pattern.permute.xlu0 0
    %190 = vperm.xlu0 %189, %v164
    %v191 = vpop.permute.xlu0 %190
    %194 = vset.pattern.permute.xlu0 0
    %195 = vperm.xlu0 %194, %v165
    %v196 = vpop.permute.xlu0 %195
    %199 = vset.pattern.permute.xlu0 0
    %200 = vperm.xlu0 %199, %v166
    %v201 = vpop.permute.xlu0 %200
    %204 = vset.pattern.permute.xlu0 0
    %205 = vperm.xlu0 %204, %v167
    %v206 = vpop.permute.xlu0 %205
    %v209 = vperm.slane %v31, 0
    %v211 = vmul.f32 %v171, %v209
    %v212 = vmul.f32 %v176, %v209
    %v213 = vmul.f32 %v181, %v209
    %v214 = vmul.f32 %v186, %v209
    %v215 = vmul.f32 %v191, %v209
    %v216 = vmul.f32 %v196, %v209
    %v217 = vmul.f32 %v201, %v209
    %v218 = vmul.f32 %v206, %v209
    %v219 = vmul.f32 %v15, %v15
    %v220 = vmul.f32 %v16, %v16
    %v221 = vmul.f32 %v17, %v17
    %v222 = vmul.f32 %v18, %v18
    %v223 = vmul.f32 %v19, %v19
    %v224 = vmul.f32 %v20, %v20
    %v225 = vmul.f32 %v21, %v21
    %v226 = vmul.f32 %v22, %v22
    %v227 = vmul.f32 %v31, %v31
    %229 = vset.pattern.permute.xlu0 0
    %230 = vperm.xlu0 %229, %v219
    %v231 = vpop.permute.xlu0 %230
    %234 = vset.pattern.permute.xlu0 0
    %235 = vperm.xlu0 %234, %v220
    %v236 = vpop.permute.xlu0 %235
    %239 = vset.pattern.permute.xlu0 0
    %240 = vperm.xlu0 %239, %v221
    %v241 = vpop.permute.xlu0 %240
    %244 = vset.pattern.permute.xlu0 0
    %245 = vperm.xlu0 %244, %v222
    %v246 = vpop.permute.xlu0 %245
    %249 = vset.pattern.permute.xlu0 0
    %250 = vperm.xlu0 %249, %v223
    %v251 = vpop.permute.xlu0 %250
    %254 = vset.pattern.permute.xlu0 0
    %255 = vperm.xlu0 %254, %v224
    %v256 = vpop.permute.xlu0 %255
    %259 = vset.pattern.permute.xlu0 0
    %260 = vperm.xlu0 %259, %v225
    %v261 = vpop.permute.xlu0 %260
    %264 = vset.pattern.permute.xlu0 0
    %265 = vperm.xlu0 %264, %v226
    %v266 = vpop.permute.xlu0 %265
    %v268 = vadd.f32 %v211, %v231
    %v269 = vadd.f32 %v212, %v236
    %v270 = vadd.f32 %v213, %v241
    %v271 = vadd.f32 %v214, %v246
    %v272 = vadd.f32 %v215, %v251
    %v273 = vadd.f32 %v216, %v256
    %v274 = vadd.f32 %v217, %v261
    %v275 = vadd.f32 %v218, %v266
    %v277 = vperm.slane %v227, 0
    %v279 = vadd.f32 %v268, %v277
    %v280 = vadd.f32 %v269, %v277
    %v281 = vadd.f32 %v270, %v277
    %v282 = vadd.f32 %v271, %v277
    %v283 = vadd.f32 %v272, %v277
    %v284 = vadd.f32 %v273, %v277
    %v285 = vadd.f32 %v274, %v277
    %v286 = vadd.f32 %v275, %v277
    %v287 = vand.u32 2147483647, %v279
    %v288 = vand.u32 2147483647, %v280
    %v289 = vand.u32 2147483647, %v281
    %v290 = vand.u32 2147483647, %v282
    %v291 = vand.u32 2147483647, %v283
    %v292 = vand.u32 2147483647, %v284
    %v293 = vand.u32 2147483647, %v285
    %v294 = vand.u32 2147483647, %v286
    %v295 = vsub.f32 0.0, %v287
    %v296 = vsub.f32 0.0, %v288
    %v297 = vsub.f32 0.0, %v289
    %v298 = vsub.f32 0.0, %v290
    %v299 = vsub.f32 0.0, %v291
    %v300 = vsub.f32 0.0, %v292
    %v301 = vsub.f32 0.0, %v293
    %v302 = vsub.f32 0.0, %v294
    %304 = vset.pattern.permute.xlu0 0
    %305 = vperm.xlu0 %304, %v152
    %v306 = vpop.permute.xlu0 %305
    %309 = vset.pattern.permute.xlu0 0
    %310 = vperm.xlu0 %309, %v153
    %v311 = vpop.permute.xlu0 %310
    %314 = vset.pattern.permute.xlu0 0
    %315 = vperm.xlu0 %314, %v154
    %v316 = vpop.permute.xlu0 %315
    %319 = vset.pattern.permute.xlu0 0
    %320 = vperm.xlu0 %319, %v155
    %v321 = vpop.permute.xlu0 %320
    %324 = vset.pattern.permute.xlu0 0
    %325 = vperm.xlu0 %324, %v156
    %v326 = vpop.permute.xlu0 %325
    %329 = vset.pattern.permute.xlu0 0
    %330 = vperm.xlu0 %329, %v157
    %v331 = vpop.permute.xlu0 %330
    %334 = vset.pattern.permute.xlu0 0
    %335 = vperm.xlu0 %334, %v158
    %v336 = vpop.permute.xlu0 %335
    %339 = vset.pattern.permute.xlu0 0
    %340 = vperm.xlu0 %339, %v159
    %v341 = vpop.permute.xlu0 %340
    %v343 = vmul.f32 %v295, %v306
    %v344 = vmul.f32 %v296, %v311
    %v345 = vmul.f32 %v297, %v316
    %v346 = vmul.f32 %v298, %v321
    %v347 = vmul.f32 %v299, %v326
    %v348 = vmul.f32 %v300, %v331
    %v349 = vmul.f32 %v301, %v336
    %v350 = vmul.f32 %v302, %v341
    %v351 = vmul.f32 %v343, 1.442695
    %v352 = vpow.pop %v351
    %v353 = vmul.f32 %v344, 1.442695
    %v354 = vpow.pop %v353
    %v355 = vmul.f32 %v345, 1.442695
    %v356 = vpow.pop %v355
    %v357 = vmul.f32 %v346, 1.442695
    %v358 = vpow.pop %v357
    %v359 = vmul.f32 %v347, 1.442695
    %v360 = vpow.pop %v359
    %v361 = vmul.f32 %v348, 1.442695
    %v362 = vpow.pop %v361
    %v363 = vmul.f32 %v349, 1.442695
    %v364 = vpow.pop %v363
    %v365 = vmul.f32 %v350, 1.442695
    %v366 = vpow.pop %v365
    %368 = vset.pattern.permute.xlu0 0
    %369 = vperm.xlu0 %368, %v46
    %v370 = vpop.permute.xlu0 %369
    %373 = vset.pattern.permute.xlu0 0
    %374 = vperm.xlu0 %373, %v61
    %v375 = vpop.permute.xlu0 %374
    %378 = vset.pattern.permute.xlu0 0
    %379 = vperm.xlu0 %378, %v76
    %v380 = vpop.permute.xlu0 %379
    %383 = vset.pattern.permute.xlu0 0
    %384 = vperm.xlu0 %383, %v91
    %v385 = vpop.permute.xlu0 %384
    %388 = vset.pattern.permute.xlu0 0
    %389 = vperm.xlu0 %388, %v106
    %v390 = vpop.permute.xlu0 %389
    %393 = vset.pattern.permute.xlu0 0
    %394 = vperm.xlu0 %393, %v121
    %v395 = vpop.permute.xlu0 %394
    %398 = vset.pattern.permute.xlu0 0
    %399 = vperm.xlu0 %398, %v136
    %v400 = vpop.permute.xlu0 %399
    %403 = vset.pattern.permute.xlu0 0
    %404 = vperm.xlu0 %403, %v151
    %v405 = vpop.permute.xlu0 %404
    %v407 = vmul.f32 %v352, %v370
    %v408 = vmul.f32 %v354, %v375
    %v409 = vmul.f32 %v356, %v380
    %v410 = vmul.f32 %v358, %v385
    %v411 = vmul.f32 %v360, %v390
    %v412 = vmul.f32 %v362, %v395
    %v413 = vmul.f32 %v364, %v400
    %v414 = vmul.f32 %v366, %v405
    %v415 = vmax.f32 %v407, 1e-05
    %v416 = vmax.f32 %v408, 1e-05
    %v417 = vmax.f32 %v409, 1e-05
    %v418 = vmax.f32 %v410, 1e-05
    %v419 = vmax.f32 %v411, 1e-05
    %v420 = vmax.f32 %v412, 1e-05
    %v421 = vmax.f32 %v413, 1e-05
    %v422 = vmax.f32 %v414, 1e-05
    %v423 = vlaneseq
    %v424 = vand.u32 %v423, 127
    %vm425 = vcmp.lt.s32.totalorder %v424, 16
    %v426 = vsel %vm425, %v415, 0.0
    %v427 = vsel %vm425, %v416, 0.0
    %v428 = vsel %vm425, %v417, 0.0
    %v429 = vsel %vm425, %v418, 0.0
    %v430 = vsel %vm425, %v419, 0.0
    %v431 = vsel %vm425, %v420, 0.0
    %v432 = vsel %vm425, %v421, 0.0
    %v433 = vsel %vm425, %v422, 0.0
    %434 = vadd.xlane.f32.xlu0 %v426
    %v435 = vpop.xlane.xlu0 %434
    %436 = vadd.xlane.f32.xlu0 %v427
    %v437 = vpop.xlane.xlu0 %436
    %438 = vadd.xlane.f32.xlu0 %v428
    %v439 = vpop.xlane.xlu0 %438
    %440 = vadd.xlane.f32.xlu0 %v429
    %v441 = vpop.xlane.xlu0 %440
    %442 = vadd.xlane.f32.xlu0 %v430
    %v443 = vpop.xlane.xlu0 %442
    %444 = vadd.xlane.f32.xlu0 %v431
    %v445 = vpop.xlane.xlu0 %444
    %446 = vadd.xlane.f32.xlu0 %v432
    %v447 = vpop.xlane.xlu0 %446
    %448 = vadd.xlane.f32.xlu0 %v433
    %v449 = vpop.xlane.xlu0 %448
    %v450 = vmul.f32 %v435, 0.0625
    %v451 = vmul.f32 %v437, 0.0625
    %v452 = vmul.f32 %v439, 0.0625
    %v453 = vmul.f32 %v441, 0.0625
    %v454 = vmul.f32 %v443, 0.0625
    %v455 = vmul.f32 %v445, 0.0625
    %v456 = vmul.f32 %v447, 0.0625
    %v457 = vmul.f32 %v449, 0.0625
    %v458 = vlog2.pop %v450
    %v459 = vmul.f32 %v458, 0.6931472
    %v460 = vlog2.pop %v451
    %v461 = vmul.f32 %v460, 0.6931472
    %v462 = vlog2.pop %v452
    %v463 = vmul.f32 %v462, 0.6931472
    %v464 = vlog2.pop %v453
    %v465 = vmul.f32 %v464, 0.6931472
    %v466 = vlog2.pop %v454
    %v467 = vmul.f32 %v466, 0.6931472
    %v468 = vlog2.pop %v455
    %v469 = vmul.f32 %v468, 0.6931472
    %v470 = vlog2.pop %v456
    %v471 = vmul.f32 %v470, 0.6931472
    %v472 = vlog2.pop %v457
    %v473 = vmul.f32 %v472, 0.6931472
    %v474 = vsub.f32 0.0, %v459
    %v475 = vsub.f32 0.0, %v461
    %v476 = vsub.f32 0.0, %v463
    %v477 = vsub.f32 0.0, %v465
    %v478 = vsub.f32 0.0, %v467
    %v479 = vsub.f32 0.0, %v469
    %v480 = vsub.f32 0.0, %v471
    %v481 = vsub.f32 0.0, %v473
    %s482 = smul.u32 0, 64
    %v483 = vlaneseq
    %v484 = vshrl.u32 %v483, 7
    %v485 = vadd.s32 %v484, 8
    %v486 = vadd.s32 %v484, 16
    %v487 = vadd.s32 %v484, 24
    %v488 = vadd.s32 %v484, 32
    %v489 = vadd.s32 %v484, 40
    %v490 = vadd.s32 %v484, 48
    %v491 = vadd.s32 %v484, 56
    %v492 = vstv %s482
    %v493 = vadd.s32 %v492, %v484
    %v494 = vadd.s32 %v492, %v485
    %v495 = vadd.s32 %v492, %v486
    %v496 = vadd.s32 %v492, %v487
    %v497 = vadd.s32 %v492, %v488
    %v498 = vadd.s32 %v492, %v489
    %v499 = vadd.s32 %v492, %v490
    %v500 = vadd.s32 %v492, %v491
    %vm501 = vcmp.lt.s32.totalorder %v493, 64
    %vm502 = vcmp.lt.s32.totalorder %v494, 64
    %vm503 = vcmp.lt.s32.totalorder %v495, 64
    %vm504 = vcmp.lt.s32.totalorder %v496, 64
    %vm505 = vcmp.lt.s32.totalorder %v497, 64
    %vm506 = vcmp.lt.s32.totalorder %v498, 64
    %vm507 = vcmp.lt.s32.totalorder %v499, 64
    %vm508 = vcmp.lt.s32.totalorder %v500, 64
    %v509 = vsel %vm501, %v474, 0.0
    %v510 = vsel %vm502, %v475, 0.0
    %v511 = vsel %vm503, %v476, 0.0
    %v512 = vsel %vm504, %v477, 0.0
    %v513 = vsel %vm505, %v478, 0.0
    %v514 = vsel %vm506, %v479, 0.0
    %v515 = vsel %vm507, %v480, 0.0
    %v516 = vsel %vm508, %v481, 0.0
    %vm517 = vcmask 7168
    %v518 = vsel %vm517, %v509, 0.0
    %v519 = vsel %vm517, %v510, 0.0
    %v520 = vadd.f32 %v518, %v519
    %v521 = vsel %vm517, %v511, 0.0
    %v522 = vadd.f32 %v520, %v521
    %v523 = vsel %vm517, %v512, 0.0
    %v524 = vadd.f32 %v522, %v523
    %v525 = vsel %vm517, %v513, 0.0
    %v526 = vadd.f32 %v524, %v525
    %v527 = vsel %vm517, %v514, 0.0
    %v528 = vadd.f32 %v526, %v527
    %v529 = vsel %vm517, %v515, 0.0
    %v530 = vadd.f32 %v528, %v529
    %v531 = vsel %vm517, %v516, 0.0
    %v532 = vadd.f32 %v530, %v531
    %533 = vadd.xlane.f32.xlu0 %v532
    %v534 = vpop.xlane.xlu0 %533
    %v535 = vrot.slane %v534, 4
    %v536 = vadd.f32 %v534, %v535
    %v537 = vrot.slane %v536, 2
    %v538 = vadd.f32 %v536, %v537
    %v539 = vrot.slane %v538, 1
    %v540 = vadd.f32 %v538, %v539
    %s541 = vtos %v540
    %v542 = vstv %s541
    %543 = vst [vmem:[#allocation2] sm:$0x1] %v542
    // Predicated region
    $region14: #{tpu_custom_call.1} parent=1 // pred_check
      _
    $region15: #{tpu_custom_call.1} parent=1 // pred_check_branch
      %545 = sbr.rel (0) target = $region17
    $region16: #{tpu_custom_call.1} parent=1 // pred_region
      %547 = vsyncadd [#allocation3], 0
      %s549 = sshll.u32 [#allocation2], 4
      %s550 = int_to_ptr.vmem [resolvable:$true] %s549
      %s551 = sshll.u32 %s3, 4
      %s552 = int_to_ptr.hbm [resolvable:$true] %s551
      %554 = dma.vmem_to_hbm [thread:$0]  %s550, 16, %s552, [#allocation3]
    $region17: #{tpu_custom_call.1} parent=1 // pred_fallthru
      _
    // Predicated region
    $region18: #{tpu_custom_call.1} parent=1 // pred_check
      _
    $region19: #{tpu_custom_call.1} parent=1 // pred_check_branch
      %556 = sbr.rel (0) target = $region21
    $region20: #{tpu_custom_call.1} parent=1 // pred_region
      %558 = dma.done [#allocation3], 16
    $region21: #{tpu_custom_call.1} parent=1 // pred_fallthru
      _
    %559 = vsyncpa [#allocation3], 1

</llo_original>
